<compile_context>
chip_gen: v7x
topology: tpu7x:2x2x1
jax: 0.10.0
libtpu: 0.0.40
codegen_flags: <defaults>
</compile_context>

<pallas_src>
import functools
import math

import jax
import jax.numpy as jnp
from jax.experimental import pallas as pl
from jax.experimental.pallas import tpu as pltpu


def _round_up(v, m):
    return (v + m - 1) // m * m


def _vmem_capacity_bytes():
    try:
        return int(pltpu.get_tpu_info().vmem_capacity_bytes)
    except Exception:                                   # conservative fallback
        return 64 * 1024 * 1024


# ---------------------------------------------------------------------------
# Prologue kernel: flat QKV + skip projection (full-lane MXU matmul).
# ---------------------------------------------------------------------------
def _proj_kernel(x_ref, w_ref, b_ref, o_ref):
    o_ref[...] = (jnp.dot(x_ref[...], w_ref[...],
                          preferred_element_type=jnp.float32)
                  + b_ref[...]).astype(o_ref.dtype)


def _project(x_pad, w_all, b_all, *, tile_r, vmem_limit):
    n_pad, cin_pad = x_pad.shape
    wtot = w_all.shape[1]
    return pl.pallas_call(
        _proj_kernel,
        grid=(n_pad // tile_r,),
        in_specs=[
            pl.BlockSpec((tile_r, cin_pad), lambda i: (i, 0)),   # x rows, tiled
            pl.BlockSpec((cin_pad, wtot), lambda i: (0, 0)),     # W (resident)
            pl.BlockSpec((1, wtot), lambda i: (0, 0)),           # b (resident)
        ],
        out_specs=pl.BlockSpec((tile_r, wtot), lambda i: (i, 0)),
        out_shape=jax.ShapeDtypeStruct((n_pad, wtot), jnp.bfloat16),
        compiler_params=pltpu.CompilerParams(
            dimension_semantics=("parallel",),
            vmem_limit_bytes=vmem_limit),
    )(x_pad, w_all, b_all)


# ---------------------------------------------------------------------------
# Main kernel: masked multi-head attention with online softmax over KV blocks,
# plus fused skip-projection beta gate and optional ReLU epilogue.
# ---------------------------------------------------------------------------
def _attn_kernel(q_ref, k_ref, v_ref, adj_ref, r_ref, wbo_ref, wbr_ref,
                 o_ref, m_sc, l_sc, acc_sc, *, heads, apply_relu):
    j = pl.program_id(1)

    @pl.when(j == 0)
    def _():
        m_sc[...] = jnp.full(m_sc.shape, -1e30, m_sc.dtype)
        l_sc[...] = jnp.zeros(l_sc.shape, l_sc.dtype)
        acc_sc[...] = jnp.zeros(acc_sc.shape, acc_sc.dtype)

    adj = adj_ref[...].astype(jnp.float32)               # [Tq, Tkv] 0/1
    neg_bias = (adj - 1.0) * 1e30                         # 0 (edge) / -1e30 (no edge)

    # Scores; 1/sqrt(d) already folded into Wq / bq.
    s = jnp.einsum('htd,hnd->htn', q_ref[...], k_ref[...],
                   preferred_element_type=jnp.float32)    # [H,Tq,Tkv] f32
    s = s + neg_bias[None]

    m_prev = m_sc[...]
    m_new = jnp.maximum(m_prev, jnp.max(s, axis=-1, keepdims=True))
    a = jnp.exp(m_prev - m_new)
    # Multiplicative mask keeps rows with no incoming edges (and padding) at 0.
    p = jnp.exp(s - m_new) * adj[None]
    l_sc[...] = a * l_sc[...] + jnp.sum(p, axis=-1, keepdims=True)
    acc_sc[...] = a * acc_sc[...] + jnp.einsum(
        'htn,hnd->htd', p.astype(jnp.bfloat16), v_ref[...],
        preferred_element_type=jnp.float32)
    m_sc[...] = m_new

    @pl.when(j == pl.num_programs(1) - 1)
    def _():
        l = l_sc[...]
        # Softmax normalization + 1/heads head-mean applied on [H,T,d], not [H,T,N].
        inv = pl.reciprocal(jnp.where(l > 0, l, 1.0), approx=True) * (1.0 / heads)
        out = jnp.sum(acc_sc[...] * inv, axis=0)          # [Tq, d_pad]
        r = r_ref[...].astype(jnp.float32)                # skip projection rows
        # Folded beta gate: sigmoid(out @ (wb0+wb2) + r @ (wb1-wb2)).
        g = jax.nn.sigmoid(jnp.sum(out * wbo_ref[...], axis=-1, keepdims=True)
                           + jnp.sum(r * wbr_ref[...], axis=-1, keepdims=True))
        y = g * r + (1.0 - g) * out
        if apply_relu:                                    # inter-layer ReLU fused
            y = jnp.maximum(y, 0.0)
        pad = o_ref.shape[-1] - y.shape[-1]               # lane-dense output slab
        if pad > 0:
            y = jnp.concatenate([y, jnp.zeros((y.shape[0], pad), y.dtype)], axis=-1)
        o_ref[...] = y.astype(o_ref.dtype)


def _attention(q, k, v, adj, r, wbo, wbr, *, heads, d_pad, out_slab,
               tile_q, tile_kv, apply_relu, out_dtype, vmem_limit):
    n_pad = q.shape[1]
    grid = (n_pad // tile_q, n_pad // tile_kv)
    kernel = functools.partial(_attn_kernel, heads=heads, apply_relu=apply_relu)
    return pl.pallas_call(
        kernel,
        grid=grid,
        in_specs=[
            pl.BlockSpec((heads, tile_q, d_pad), lambda i, j: (0, i, 0)),   # Q rows
            pl.BlockSpec((heads, tile_kv, d_pad), lambda i, j: (0, j, 0)),  # K blk
            pl.BlockSpec((heads, tile_kv, d_pad), lambda i, j: (0, j, 0)),  # V blk
            pl.BlockSpec((tile_q, tile_kv), lambda i, j: (i, j)),           # adj blk
            pl.BlockSpec((tile_q, d_pad), lambda i, j: (i, 0)),             # skip rows
            pl.BlockSpec((1, d_pad), lambda i, j: (0, 0)),                  # beta w_out
            pl.BlockSpec((1, d_pad), lambda i, j: (0, 0)),                  # beta w_root
        ],
        out_specs=pl.BlockSpec((tile_q, out_slab), lambda i, j: (i, 0)),
        out_shape=jax.ShapeDtypeStruct((n_pad, out_slab), out_dtype),
        scratch_shapes=[
            pltpu.VMEM((heads, tile_q, 1), jnp.float32),       # running max
            pltpu.VMEM((heads, tile_q, 1), jnp.float32),       # running sum
            pltpu.VMEM((heads, tile_q, d_pad), jnp.float32),   # running AV acc
        ],
        compiler_params=pltpu.CompilerParams(
            dimension_semantics=("parallel", "arbitrary"),
            vmem_limit_bytes=vmem_limit),
    )(q, k, v, adj, r, wbo, wbr)


# ---------------------------------------------------------------------------
# Parameter preparation: pad, concat Q|K|V|skip, fold scale and beta weights.
# ---------------------------------------------------------------------------
def _prepare_layer_params(p, cin, d, heads, cin_pad, d_pad):
    scale = 1.0 / math.sqrt(d)
    hd = heads * d_pad

    def pad_hd(w, b, mul=1.0):
        w3 = jnp.pad(w.reshape(cin, heads, d),
                     ((0, cin_pad - cin), (0, 0), (0, d_pad - d))).reshape(cin_pad, hd)
        b3 = jnp.pad(b.reshape(1, heads, d),
                     ((0, 0), (0, 0), (0, d_pad - d))).reshape(1, hd)
        return w3 * mul, b3 * mul

    wq, bq = pad_hd(p["wq"], p["bq"], mul=scale)          # 1/sqrt(d) folded in
    wk, bk = pad_hd(p["wk"], p["bk"])
    wv, bv = pad_hd(p["wv"], p["bv"])
    ws = jnp.pad(p["wskip"], ((0, cin_pad - cin), (0, d_pad - d)))
    bs = jnp.pad(p["bskip"], ((0, 0), (0, d_pad - d)))

    w_all = jnp.concatenate([wq, wk, wv, ws], axis=1).astype(jnp.bfloat16)
    b_all = jnp.concatenate([bq, bk, bv, bs], axis=1).astype(jnp.float32)

    wb = p["wbeta"]                                       # [3d, 1], bias=False
    wb0, wb1, wb2 = wb[:d, 0], wb[d:2 * d, 0], wb[2 * d:, 0]
    wbo = jnp.pad((wb0 + wb2)[None, :], ((0, 0), (0, d_pad - d))).astype(jnp.float32)
    wbr = jnp.pad((wb1 - wb2)[None, :], ((0, 0), (0, d_pad - d))).astype(jnp.float32)
    return w_all, b_all, wbo, wbr


def init_transformer_params(key, in_channels, hidden_channels, out_channels, heads):
    def init_layer(k, cin, cout):
        ks = jax.random.split(k, 5)
        rnd = lambda kk, shp: 0.1 * jax.random.normal(kk, shp, jnp.float32)
        return dict(
            wq=rnd(ks[0], (cin, heads * cout)), bq=jnp.zeros((1, heads * cout), jnp.float32),
            wk=rnd(ks[1], (cin, heads * cout)), bk=jnp.zeros((1, heads * cout), jnp.float32),
            wv=rnd(ks[2], (cin, heads * cout)), bv=jnp.zeros((1, heads * cout), jnp.float32),
            wskip=rnd(ks[3], (cin, cout)), bskip=jnp.zeros((1, cout), jnp.float32),
            wbeta=rnd(ks[4], (3 * cout, 1)),
        )
    k0, k1 = jax.random.split(key)
    return [init_layer(k0, in_channels, hidden_channels),
            init_layer(k1, hidden_channels, out_channels)]


# ---------------------------------------------------------------------------
# Forward pass: equivalent of Transformer.forward(data, proteins) -> (x, None, None)
# ---------------------------------------------------------------------------
def transformer_forward(params, x, edge_index, *, heads, hidden_channels,
                        out_channels, use_edge_attr=False, edge_attr=None):
    # TODO(synk): use_edge_attr=True path (edge-feature projection added to K/V)
    # is not wired here; args.use_edge_attr is taken as False.
    del use_edge_attr, edge_attr
    n, cin = x.shape

    # Lane-friendly padded widths (zero padding is exact: padded rows/cols are 0).
    def d_pad_of(d):
        return _round_up(d, max(8, 128 // math.gcd(heads, 128)))

    cin_pad = _round_up(cin, 128)
    hid_pad = d_pad_of(hidden_channels)
    out_pad = d_pad_of(out_channels)
    hid_slab = _round_up(hid_pad, 128)      # layer-1 output slab (feeds layer 2)
    out_slab = _round_up(out_pad, 128)      # layer-2 output slab
    d_pad_max = max(hid_pad, out_pad)

    vmem_cap = _vmem_capacity_bytes()
    vmem_limit = int(max(32 * 1024 * 1024, vmem_cap * 3 // 4))
    budget = int(vmem_cap * 0.55)

    # VMEM-aware row/kv tiling for the attention kernel.
    if n <= 256:
        # >= 2 row blocks so "parallel" can shard across v7x's 2 TensorCores.
        tile_q = max(8, _round_up(-(-n // 2), 8))
        n_pad = _round_up(n, tile_q)
        tile_kv = n_pad                      # single KV block for small graphs
    else:
        tile_q, tile_kv = 256, 512

        def est(tq, tkv):
            inter = 3 * heads * tq * tkv * 4              # s/p live copies (f32)
            kv = 2 * 2 * heads * tkv * d_pad_max * 2      # K,V double-buffered bf16
            qb = 2 * heads * tq * d_pad_max * 2
            adjb = 2 * tq * tkv * 2
            scr = heads * tq * (d_pad_max + 2) * 4
            outb = 2 * tq * max(hid_slab, out_slab) * 4
            return inter + kv + qb + adjb + scr + outb

        while tile_kv > 128 and est(tile_q, tile_kv) > budget:
            tile_kv //= 2
        while tile_q > 64 and est(tile_q, tile_kv) > budget:
            tile_q //= 2
        n_pad = _round_up(n, max(tile_q, tile_kv))

    # Dense bf16 adjacency mask: adj[i, j] = 1 iff edge j -> i.
    # NOTE: duplicate directed edges collapse to one entry (differs from PyG on multigraphs).
    adj = jnp.zeros((n_pad, n_pad), jnp.bfloat16).at[edge_index[1], edge_index[0]].set(1.0)
    x_pad = jnp.zeros((n_pad, cin_pad), jnp.bfloat16).at[:n, :cin].set(
        x.astype(jnp.bfloat16))

    def layer(x_in, p, cin_l, d, d_pad, slab, apply_relu, out_dtype):
        cin_pad_l = x_in.shape[1]
        w_all, b_all, wbo, wbr = _prepare_layer_params(p, cin_l, d, heads,
                                                       cin_pad_l, d_pad)
        hd = heads * d_pad
        # One flat projection per layer (Q|K|V|skip) -> [n_pad, 3*hd + d_pad] bf16.
        proj = _project(x_in, w_all, b_all, tile_r=tile_q, vmem_limit=vmem_limit)
        qkv = proj[:, :3 * hd].reshape(n_pad, 3, heads, d_pad).transpose(1, 2, 0, 3)
        q, k, v = qkv[0], qkv[1], qkv[2]                   # [H, n_pad, d_pad] bf16
        r = proj[:, 3 * hd:]                               # [n_pad, d_pad] bf16
        return _attention(q, k, v, adj, r, wbo, wbr, heads=heads, d_pad=d_pad,
                          out_slab=slab, tile_q=tile_q, tile_kv=tile_kv,
                          apply_relu=apply_relu, out_dtype=out_dtype,
                          vmem_limit=vmem_limit)

    h = layer(x_pad, params[0], cin, hidden_channels, hid_pad, hid_slab,
              True, jnp.bfloat16)
    y = layer(h, params[1], hidden_channels, out_channels, out_pad, out_slab,
              False, jnp.float32)
    return y[:n, :out_channels], None, None


if __name__ == "__main__":
    key = jax.random.PRNGKey(0)
    kx, ke, kp = jax.random.split(key, 3)

    N, IN_C = 16, 16          # nodes, in_channels
    HIDDEN = IN_C             # gnn_hid_channels = -1  -> in_channels
    OUT_C = 1                 # default out_channels
    HEADS = 8
    E = 48                    # number of directed edges

    x = jax.random.normal(kx, (N, IN_C), jnp.float32)
    src = jax.random.randint(ke, (E,), 0, N)
    dst = jax.random.randint(jax.random.fold_in(ke, 1), (E,), 0, N)
    edge_index = jnp.stack([src, dst]).astype(jnp.int32)   # [2, E]

    params = init_transformer_params(kp, IN_C, HIDDEN, OUT_C, HEADS)

    y, _, _ = transformer_forward(params, x, edge_index,
                                  heads=HEADS, hidden_channels=HIDDEN,
                                  out_channels=OUT_C)
    jax.block_until_ready(y)
    assert y.shape == (N, OUT_C) and bool(jnp.all(jnp.isfinite(y)))
    print("KERNEL_OK")
</pallas_src>

<mosaic_0001>
module attributes {stable_mosaic.version = 11 : i64} {
  func.func @_proj_kernel(%arg0: i32, %arg1: memref<8x128xbf16, #tpu.memory_space<vmem>>, %arg2: memref<128x400xbf16, #tpu.memory_space<vmem>>, %arg3: memref<1x400xf32, #tpu.memory_space<vmem>>, %arg4: memref<8x400xbf16, #tpu.memory_space<vmem>>) attributes {dimension_semantics = [#tpu.dimension_semantics<parallel>], iteration_bounds = array<i64: 2>, scalar_prefetch = 0 : i64, scratch_operands = 0 : i64, tpu.core_type = #tpu.core_type<tc>, window_params = [{transform_indices = @transform_0, window_bounds = array<i64: 8, 128>}, {pipeline_mode = #tpu.pipeline_mode<synchronous>, transform_indices = @transform_1, window_bounds = array<i64: 128, 400>}, {pipeline_mode = #tpu.pipeline_mode<synchronous>, transform_indices = @transform_2, window_bounds = array<i64: 1, 400>}, {transform_indices = @transform_3, window_bounds = array<i64: 8, 400>}]} {
    %c0 = arith.constant 0 : index
    %c0_0 = arith.constant 0 : index
    %0 = vector.load %arg1[%c0, %c0_0] : memref<8x128xbf16, #tpu.memory_space<vmem>>, vector<8x128xbf16>
    %c0_1 = arith.constant 0 : index
    %c0_2 = arith.constant 0 : index
    %1 = vector.load %arg2[%c0_1, %c0_2] : memref<128x400xbf16, #tpu.memory_space<vmem>>, vector<128x400xbf16>
    %cst = arith.constant dense<0.000000e+00> : vector<8x400xf32>
    %2 = tpu.matmul %0, %1, %cst {dimension_numbers = #tpu.dot_dimension_numbers<[1], [0], [0], [1], [0, 0, 1, 1], [], []>} : vector<8x128xbf16>, vector<128x400xbf16>, vector<8x400xf32> -> vector<8x400xf32>
    %c0_3 = arith.constant 0 : index
    %c0_4 = arith.constant 0 : index
    %3 = vector.load %arg3[%c0_3, %c0_4] : memref<1x400xf32, #tpu.memory_space<vmem>>, vector<1x400xf32>
    %4 = vector.broadcast %3 : vector<1x400xf32> to vector<8x400xf32>
    %5 = arith.addf %2, %4 : vector<8x400xf32>
    %6 = arith.truncf %5 : vector<8x400xf32> to vector<8x400xbf16>
    %c0_5 = arith.constant 0 : index
    %c0_6 = arith.constant 0 : index
    %7 = vector.load %arg4[%c0_5, %c0_6] : memref<8x400xbf16, #tpu.memory_space<vmem>>, vector<8x400xbf16>
    tpu.vector_store %arg4[%c0_5, %c0_6], %6 {strides = array<i32>} : memref<8x400xbf16, #tpu.memory_space<vmem>>, vector<8x400xbf16>,
    return
  }
  func.func @transform_0(%arg0: i32) -> (i32, i32) {
    %c0_i32 = arith.constant 0 : i32
    %c0_i32_0 = arith.constant 0 : i32
    return %arg0, %c0_i32 : i32, i32
  }
  func.func @transform_1(%arg0: i32) -> (i32, i32) {
    %c0_i32 = arith.constant 0 : i32
    %c0_i32_0 = arith.constant 0 : i32
    %c0_i32_1 = arith.constant 0 : i32
    return %c0_i32, %c0_i32_0 : i32, i32
  }
  func.func @transform_2(%arg0: i32) -> (i32, i32) {
    %c0_i32 = arith.constant 0 : i32
    %c0_i32_0 = arith.constant 0 : i32
    %c0_i32_1 = arith.constant 0 : i32
    return %c0_i32, %c0_i32_0 : i32, i32
  }
  func.func @transform_3(%arg0: i32) -> (i32, i32) {
    %c0_i32 = arith.constant 0 : i32
    %c0_i32_0 = arith.constant 0 : i32
    return %arg0, %c0_i32 : i32, i32
  }
}

</mosaic_0001>

<llo_original>
// kernel: tpu_custom_call.1
$region0: #{tpu_custom_call.1}
  #allocation0 [shape = 'u32[]', space=smem, size = 0x4, offset = 0x4, fixed_abs, tag = 'smem constant byte address 0x4 - core index']
  #allocation1 [shape = 'u32[144,128]{1,0:T(1,128)}', space=vmem, size = 0x12000, scoped, tag = 'internal scratch']
  %s0 = inlined_call_operand.vmem [shape: bf16[16,128], index: 0, kind: input, shape index: {}]
  %s1 = inlined_call_operand.vmem [shape: bf16[128,400], index: 1, kind: input, shape index: {}]
  %s2 = inlined_call_operand.vmem [shape: f32[1,400], index: 2, kind: input, shape index: {}]
  %s3 = inlined_call_operand.hbm [shape: bf16[16,400], index: 3, kind: output, shape index: {}]
  %s4 = sld [smem:[#allocation0]]
  $region45: #{tpu_custom_call.1} parent=0
    _
  %s6 = ssub.s32 1, %s4
  %s7 = scalar_select 0, %s6, %s4
  $region1: #{tpu_custom_call.1} parent=0
    #allocation2 [shape = 'u8[16384]{0}', space=vmem, size = 0x4000, scoped, tag = 'output window, operand 0']
    #allocation3 [shape = 's32[2]{0}', space=sflag, size = 0x8, scoped, tag = 'scoped memory for tpu_custom_call.1']
    %8 = vsyncpa [#allocation3], 0
    %s9 = scalar_lea.sflag [#allocation3], 1
    %10 = vsyncpa %s9, 0
    loop: start=0, step=1, limit=4
    $region2: #{tpu_custom_call.1} parent=1 // loop_pre_header
      _
    $region3: #{tpu_custom_call.1} parent=1 // loop_header
      %s12 = sphi 0, %s16
      %p13 = scmp.ge.s32.totalorder %s12, 4
      %s22 = sphi 0, %s24
      %s25 = sphi 0, %s22
      %s26 = sphi 0, %s25
      %s42 = sphi 0, %s26
      %s46 = sphi 0, %s46
      %s48 = sphi 0, %s46
      %s49 = sphi 0, %s48
      %s63 = sphi 0, %s49
      %s67 = sphi 0, %s67
      %s69 = sphi 0, %s67
      %s70 = sphi 0, %s69
      %s84 = sphi 0, %s70
      %s90 = sphi 0, %s92
      %s93 = sphi 0, %s90
      %s94 = sphi 0, %s93
      %s110 = sphi 0, %s94
    $region4: #{tpu_custom_call.1} parent=1 // loop_header_branch
      %15 = sbr.rel (%p13) target = $region8
    $region5: #{tpu_custom_call.1} parent=1 // loop_body
      %s17 = ssub.s32 %s12, 1
      %s18 = ssub.s32 %s12, 2
      %s19 = sadd.s32 %s12, 1
      %s20 = ssub.s32 %s12, %s19
      %p21 = scmp.eq.s32.totalorder %s20, 0
      %s23 = sadd.s32 %s22, 1
      %s24 = scalar_select %p21, %s22, %s23
      %p27 = pneg %p21
      %p28 = scmp.eq.s32.totalorder %s12, 1
      %p29 = por %p27, %p28
      %p30 = scmp.ne.s32.totalorder %s22, %s25
      %p31 = scmp.eq.s32.totalorder %s12, 0
      %p32 = por %p30, %p31
      %p33 = scmp.ne.s32.totalorder %s22, %s25
      %p34 = scmp.eq.s32.totalorder %s17, 1
      %p35 = por %p33, %p34
      %p36 = scmp.ne.s32.totalorder %s25, %s26
      %p37 = scmp.eq.s32.totalorder %s17, 0
      %p38 = por %p36, %p37
      %p39 = scmp.ne.s32.totalorder %s25, %s26
      %p40 = scmp.eq.s32.totalorder %s18, 1
      %p41 = por %p39, %p40
      %p43 = scmp.ne.s32.totalorder %s26, %s42
      %p44 = scmp.eq.s32.totalorder %s18, 0
      %p45 = por %p43, %p44
      %s47 = sadd.s32 %s46, 1
      %p50 = scmp.eq.s32.totalorder %s12, 1
      %p51 = scmp.ne.s32.totalorder %s46, %s48
      %p52 = scmp.eq.s32.totalorder %s12, 0
      %p53 = por %p51, %p52
      %p54 = scmp.ne.s32.totalorder %s46, %s48
      %p55 = scmp.eq.s32.totalorder %s17, 1
      %p56 = por %p54, %p55
      %p57 = scmp.ne.s32.totalorder %s48, %s49
      %p58 = scmp.eq.s32.totalorder %s17, 0
      %p59 = por %p57, %p58
      %p60 = scmp.ne.s32.totalorder %s48, %s49
      %p61 = scmp.eq.s32.totalorder %s18, 1
      %p62 = por %p60, %p61
      %p64 = scmp.ne.s32.totalorder %s49, %s63
      %p65 = scmp.eq.s32.totalorder %s18, 0
      %p66 = por %p64, %p65
      %s68 = sadd.s32 %s67, 1
      %p71 = scmp.eq.s32.totalorder %s12, 1
      %p72 = scmp.ne.s32.totalorder %s67, %s69
      %p73 = scmp.eq.s32.totalorder %s12, 0
      %p74 = por %p72, %p73
      %p75 = scmp.ne.s32.totalorder %s67, %s69
      %p76 = scmp.eq.s32.totalorder %s17, 1
      %p77 = por %p75, %p76
      %p78 = scmp.ne.s32.totalorder %s69, %s70
      %p79 = scmp.eq.s32.totalorder %s17, 0
      %p80 = por %p78, %p79
      %p81 = scmp.ne.s32.totalorder %s69, %s70
      %p82 = scmp.eq.s32.totalorder %s18, 1
      %p83 = por %p81, %p82
      %p85 = scmp.ne.s32.totalorder %s70, %s84
      %p86 = scmp.eq.s32.totalorder %s18, 0
      %p87 = por %p85, %p86
      %s88 = ssub.s32 %s12, %s19
      %p89 = scmp.eq.s32.totalorder %s88, 0
      %s91 = sadd.s32 %s90, 1
      %s92 = scalar_select %p89, %s90, %s91
      %p95 = pneg %p89
      %p96 = scmp.eq.s32.totalorder %s12, 1
      %p97 = por %p95, %p96
      %p98 = scmp.ne.s32.totalorder %s90, %s93
      %p99 = scmp.eq.s32.totalorder %s12, 0
      %p100 = por %p98, %p99
      %p101 = scmp.ne.s32.totalorder %s90, %s93
      %p102 = scmp.eq.s32.totalorder %s17, 1
      %p103 = por %p101, %p102
      %p104 = scmp.ne.s32.totalorder %s93, %s94
      %p105 = scmp.eq.s32.totalorder %s17, 0
      %p106 = por %p104, %p105
      %p107 = scmp.ne.s32.totalorder %s93, %s94
      %p108 = scmp.eq.s32.totalorder %s18, 1
      %p109 = por %p107, %p108
      %p111 = scmp.ne.s32.totalorder %s94, %s110
      %p112 = scmp.eq.s32.totalorder %s18, 0
      %p113 = por %p111, %p112
      %p114 = scmp.le.s32.totalorder 1, %s12
      %p115 = scmp.lt.s32.totalorder %s12, 3
      %p116 = pnand %p114, %p115
      %p117 = pneg %p116
      // Predicated region
      $region9: #{tpu_custom_call.1} parent=5 // pred_check
        _
      $region10: #{tpu_custom_call.1} parent=5 // pred_check_branch
        %119 = sbr.rel (%p116) target = $region12
      $region11: #{tpu_custom_call.1} parent=5 // pred_region
        %s120 = ssub.s32 %s12, 1
        // Predicated region
        $region13: #{tpu_custom_call.1} parent=11 // pred_check
          %p121 = pneg %p59
        $region14: #{tpu_custom_call.1} parent=11 // pred_check_branch
          %123 = sbr.rel (%p121) target = $region16
        $region15: #{tpu_custom_call.1} parent=11 // pred_region
          _
        $region16: #{tpu_custom_call.1} parent=11 // pred_fallthru
          _
        // Predicated region
        $region17: #{tpu_custom_call.1} parent=11 // pred_check
          %p124 = pneg %p80
        $region18: #{tpu_custom_call.1} parent=11 // pred_check_branch
          %126 = sbr.rel (%p124) target = $region20
        $region19: #{tpu_custom_call.1} parent=11 // pred_region
          _
        $region20: #{tpu_custom_call.1} parent=11 // pred_fallthru
          _
      $region12: #{tpu_custom_call.1} parent=5 // pred_fallthru
        _
      %p127 = scmp.lt.s32.totalorder %s12, 2
      // Predicated region
      $region21: #{tpu_custom_call.1} parent=5 // pred_check
        %p128 = pneg %p127
      $region22: #{tpu_custom_call.1} parent=5 // pred_check_branch
        %130 = sbr.rel (%p128) target = $region24
      $region23: #{tpu_custom_call.1} parent=5 // pred_region
        // Predicated region
        $region25: #{tpu_custom_call.1} parent=23 // pred_check
          %p131 = pneg %p32
        $region26: #{tpu_custom_call.1} parent=23 // pred_check_branch
          %133 = sbr.rel (%p131) target = $region28
        $region27: #{tpu_custom_call.1} parent=23 // pred_region
          %p134 = scmp.lt.s32.totalorder %s12, 1
          %s135 = scalar_select %p134, %s12, 1
          %s136 = smul.addr %s135, 4
          %s137 = scalar_lea.vmem %s0, %s136
        $region28: #{tpu_custom_call.1} parent=23 // pred_fallthru
          _
      $region24: #{tpu_custom_call.1} parent=5 // pred_fallthru
        _
      %p138 = scmp.le.s32.totalorder 1, %s12
      %p139 = scmp.lt.s32.totalorder %s12, 3
      %p140 = pnand %p138, %p139
      %p141 = pneg %p140
      // Predicated region
      $region29: #{tpu_custom_call.1} parent=5 // pred_check
        _
      $region30: #{tpu_custom_call.1} parent=5 // pred_check_branch
        %143 = sbr.rel (%p140) target = $region32
      $region31: #{tpu_custom_call.1} parent=5 // pred_region
        %s144 = ssub.s32 %s12, 1
        %p145 = scmp.lt.s32.totalorder %s17, 1
        %s146 = scalar_select %p145, %s17, 1
        %s147 = smul.addr %s146, 4
        %s148 = scalar_lea.vmem %s0, %s147
        %p149 = pneg %p38
        %p150 = pneg %p35
        %p151 = pneg %p59
        %p152 = pneg %p56
        %p153 = pneg %p80
        %p154 = pneg %p77
        %p155 = pneg %p106
        %p156 = pneg %p103
        %s157 = sand.u32 %s93, 1
        %s158 = scalar_lea.sflag [#allocation3], %s157
        %s159 = sand.u32 %s93, 1
        %s160 = smul.addr %s159, 16
        %s161 = scalar_lea.vmem [#allocation2], %s160
        %p162 = scmp.lt.s32.totalorder %s17, 1
        %s163 = scalar_select %p162, %s17, 1
        %s164 = smul.addr %s163, 4
        %s165 = scalar_lea.vmem %s0, %s164
        %v167 = vld [vmem:[%s165] sm:$0xf]
        %v168 = vld [vmem:[%s1] sm:$0xff]
        %v169 = vld [vmem:[%s1 + $0x8] sm:$0xff]
        %v170 = vld [vmem:[%s1 + $0x10] sm:$0xff]
        %v171 = vld [vmem:[%s1 + $0x18] sm:$0xff]
        %v172 = vld [vmem:[%s1 + $0x20] sm:$0xff]
        %v173 = vld [vmem:[%s1 + $0x28] sm:$0xff]
        %v174 = vld [vmem:[%s1 + $0x30] sm:$0xff]
        %v175 = vld [vmem:[%s1 + $0x38] sm:$0xff]
        %v176 = vld [vmem:[%s1 + $0x40] sm:$0xff]
        %v177 = vld [vmem:[%s1 + $0x48] sm:$0xff]
        %v178 = vld [vmem:[%s1 + $0x50] sm:$0xff]
        %v179 = vld [vmem:[%s1 + $0x58] sm:$0xff]
        %v180 = vld [vmem:[%s1 + $0x60] sm:$0xff]
        %v181 = vld [vmem:[%s1 + $0x68] sm:$0xff]
        %v182 = vld [vmem:[%s1 + $0x70] sm:$0xff]
        %v183 = vld [vmem:[%s1 + $0x78] sm:$0xff]
        %v184 = vld [vmem:[%s1 + $0x80] sm:$0xff]
        %v185 = vld [vmem:[%s1 + $0x88] sm:$0xff]
        %v186 = vld [vmem:[%s1 + $0x90] sm:$0xff]
        %v187 = vld [vmem:[%s1 + $0x98] sm:$0xff]
        %v188 = vld [vmem:[%s1 + $0xa0] sm:$0xff]
        %v189 = vld [vmem:[%s1 + $0xa8] sm:$0xff]
        %v190 = vld [vmem:[%s1 + $0xb0] sm:$0xff]
        %v191 = vld [vmem:[%s1 + $0xb8] sm:$0xff]
        %v192 = vld [vmem:[%s1 + $0xc0] sm:$0xff]
        %v193 = vld [vmem:[%s1 + $0xc8] sm:$0xff]
        %v194 = vld [vmem:[%s1 + $0xd0] sm:$0xff]
        %v195 = vld [vmem:[%s1 + $0xd8] sm:$0xff]
        %v196 = vld [vmem:[%s1 + $0xe0] sm:$0xff]
        %v197 = vld [vmem:[%s1 + $0xe8] sm:$0xff]
        %v198 = vld [vmem:[%s1 + $0xf0] sm:$0xff]
        %v199 = vld [vmem:[%s1 + $0xf8] sm:$0xff]
        %v200 = vld [vmem:[%s2] sm:$0xf]
        %v202 = vlaneseq
        %v203 = vshrl.u32 %v202, 7
        %v204 = vsub.s32 0, %v203
        %v205 = vrot.slane %v200, %v204
        %v206 = vlaneseq
        %v207 = vshrl.u32 %v206, 7
        %v208 = vsub.s32 1, %v207
        %v209 = vrot.slane %v200, %v208
        %v210 = vlaneseq
        %v211 = vshrl.u32 %v210, 7
        %v212 = vsub.s32 2, %v211
        %v213 = vrot.slane %v200, %v212
        %v214 = vlaneseq
        %v215 = vshrl.u32 %v214, 7
        %v216 = vsub.s32 3, %v215
        %v217 = vrot.slane %v200, %v216
        %v254 = vunpack.c.l.b16 %v168
        %v255 = vunpack.c.h.b16 %v168
        %v256 = vunpack.c.l.b16 %v169
        %v257 = vunpack.c.h.b16 %v169
        %v258 = vunpack.c.l.b16 %v170
        %v259 = vunpack.c.h.b16 %v170
        %v260 = vunpack.c.l.b16 %v171
        %v261 = vunpack.c.h.b16 %v171
        %v262 = vunpack.c.l.b16 %v172
        %v263 = vunpack.c.h.b16 %v172
        %v264 = vunpack.c.l.b16 %v173
        %v265 = vunpack.c.h.b16 %v173
        %v266 = vunpack.c.l.b16 %v174
        %v267 = vunpack.c.h.b16 %v174
        %v268 = vunpack.c.l.b16 %v175
        %v269 = vunpack.c.h.b16 %v175
        %v270 = vunpack.c.l.b16 %v176
        %v271 = vunpack.c.h.b16 %v176
        %v272 = vunpack.c.l.b16 %v177
        %v273 = vunpack.c.h.b16 %v177
        %v274 = vunpack.c.l.b16 %v178
        %v275 = vunpack.c.h.b16 %v178
        %v276 = vunpack.c.l.b16 %v179
        %v277 = vunpack.c.h.b16 %v179
        %v278 = vunpack.c.l.b16 %v180
        %v279 = vunpack.c.h.b16 %v180
        %v280 = vunpack.c.l.b16 %v181
        %v281 = vunpack.c.h.b16 %v181
        %v282 = vunpack.c.l.b16 %v182
        %v283 = vunpack.c.h.b16 %v182
        %v284 = vunpack.c.l.b16 %v183
        %v285 = vunpack.c.h.b16 %v183
        %v286 = vunpack.c.l.b16 %v184
        %v287 = vunpack.c.h.b16 %v184
        %v288 = vunpack.c.l.b16 %v185
        %v289 = vunpack.c.h.b16 %v185
        %v290 = vunpack.c.l.b16 %v186
        %v291 = vunpack.c.h.b16 %v186
        %v292 = vunpack.c.l.b16 %v187
        %v293 = vunpack.c.h.b16 %v187
        %v294 = vunpack.c.l.b16 %v188
        %v295 = vunpack.c.h.b16 %v188
        %v296 = vunpack.c.l.b16 %v189
        %v297 = vunpack.c.h.b16 %v189
        %v298 = vunpack.c.l.b16 %v190
        %v299 = vunpack.c.h.b16 %v190
        %v300 = vunpack.c.l.b16 %v191
        %v301 = vunpack.c.h.b16 %v191
        %v302 = vunpack.c.l.b16 %v192
        %v303 = vunpack.c.h.b16 %v192
        %v304 = vunpack.c.l.b16 %v193
        %v305 = vunpack.c.h.b16 %v193
        %v306 = vunpack.c.l.b16 %v194
        %v307 = vunpack.c.h.b16 %v194
        %v308 = vunpack.c.l.b16 %v195
        %v309 = vunpack.c.h.b16 %v195
        %v310 = vunpack.c.l.b16 %v196
        %v311 = vunpack.c.h.b16 %v196
        %v312 = vunpack.c.l.b16 %v197
        %v313 = vunpack.c.h.b16 %v197
        %v314 = vunpack.c.l.b16 %v198
        %v315 = vunpack.c.h.b16 %v198
        %v316 = vunpack.c.l.b16 %v199
        %v317 = vunpack.c.h.b16 %v199
        %v318 = vpack.c.b16 %v258, %v254
        %v319 = vpack.c.b16 %v259, %v255
        %v320 = vpack.c.b16 %v260, %v256
        %v321 = vpack.c.b16 %v261, %v257
        %v322 = vpack.c.b16 %v266, %v262
        %v323 = vpack.c.b16 %v267, %v263
        %v324 = vpack.c.b16 %v268, %v264
        %v325 = vpack.c.b16 %v269, %v265
        %v326 = vpack.c.b16 %v274, %v270
        %v327 = vpack.c.b16 %v275, %v271
        %v328 = vpack.c.b16 %v276, %v272
        %v329 = vpack.c.b16 %v277, %v273
        %v330 = vpack.c.b16 %v282, %v278
        %v331 = vpack.c.b16 %v283, %v279
        %v332 = vpack.c.b16 %v284, %v280
        %v333 = vpack.c.b16 %v285, %v281
        %v334 = vpack.c.b16 %v290, %v286
        %v335 = vpack.c.b16 %v291, %v287
        %v336 = vpack.c.b16 %v292, %v288
        %v337 = vpack.c.b16 %v293, %v289
        %v338 = vpack.c.b16 %v298, %v294
        %v339 = vpack.c.b16 %v299, %v295
        %v340 = vpack.c.b16 %v300, %v296
        %v341 = vpack.c.b16 %v301, %v297
        %v342 = vpack.c.b16 %v306, %v302
        %v343 = vpack.c.b16 %v307, %v303
        %v344 = vpack.c.b16 %v308, %v304
        %v345 = vpack.c.b16 %v309, %v305
        %v346 = vpack.c.b16 %v314, %v310
        %v347 = vpack.c.b16 %v315, %v311
        %v348 = vpack.c.b16 %v316, %v312
        %v349 = vpack.c.b16 %v317, %v313
        %382 = vmatprep.subr.bf16.mxu0 %v319
        %383 = vmatpush1.bf16.msra.mxu0 %v318
        %384 = vmatprep.subr.bf16.mxu0 %v323
        %385 = vmatpush1.bf16.msra.mxu0 %v322
        %386 = vmatprep.subr.bf16.mxu0 %v327
        %387 = vmatpush1.bf16.msra.mxu0 %v326
        %388 = vmatprep.subr.bf16.mxu0 %v331
        %389 = vmatpush1.bf16.msra.mxu0 %v330
        %390 = vmatprep.subr.bf16.mxu0 %v335
        %391 = vmatpush1.bf16.msra.mxu0 %v334
        %392 = vmatprep.subr.bf16.mxu0 %v339
        %393 = vmatpush1.bf16.msra.mxu0 %v338
        %394 = vmatprep.subr.bf16.mxu0 %v343
        %395 = vmatpush1.bf16.msra.mxu0 %v342
        %396 = vmatprep.subr.bf16.mxu0 %v347
        %397 = vmatpush1.bf16.msra.mxu0 %v346
        %398 = vmatprep.subr.bf16.mxu0 0
        %399 = vmatpush1.bf16.msra.mxu0 0
        %400 = vmatprep.subr.bf16.mxu0 0
        %401 = vmatpush1.bf16.msra.mxu0 0
        %402 = vmatprep.subr.bf16.mxu0 0
        %403 = vmatpush1.bf16.msra.mxu0 0
        %404 = vmatprep.subr.bf16.mxu0 0
        %405 = vmatpush1.bf16.msra.mxu0 0
        %406 = vmatprep.subr.bf16.mxu0 0
        %407 = vmatpush1.bf16.msra.mxu0 0
        %408 = vmatprep.subr.bf16.mxu0 0
        %409 = vmatpush1.bf16.msra.mxu0 0
        %410 = vmatprep.subr.bf16.mxu0 0
        %411 = vmatpush1.bf16.msra.mxu0 0
        %412 = vmatprep.subr.bf16.mxu0 0
        %413 = vmatpush1.bf16.msra.mxu0 0
        %414 = vmatprep.mubr.bf16.mxu0 0
        %415 = vmatmul.mubr.bf16.gmra.mrb[0].mxu0 %v167
        %v416 = vpop.f32.mrb[0].mxu0
        %v417 = vadd.f32 %v205, %v416
        %v418 = vpop.f32.mrb[0].mxu0
        %v419 = vadd.f32 %v209, %v418
        %v420 = vpop.f32.mrb[0].mxu0
        %v421 = vpop.f32.mrb[0].mxu0
        %422 = vdwg.mxu0
        %423 = vmatprep.subr.bf16.mxu0 %v321
        %424 = vmatpush1.bf16.msra.mxu0 %v320
        %425 = vmatprep.subr.bf16.mxu0 %v325
        %426 = vmatpush1.bf16.msra.mxu0 %v324
        %427 = vmatprep.subr.bf16.mxu0 %v329
        %428 = vmatpush1.bf16.msra.mxu0 %v328
        %429 = vmatprep.subr.bf16.mxu0 %v333
        %430 = vmatpush1.bf16.msra.mxu0 %v332
        %431 = vmatprep.subr.bf16.mxu0 %v337
        %432 = vmatpush1.bf16.msra.mxu0 %v336
        %433 = vmatprep.subr.bf16.mxu0 %v341
        %434 = vmatpush1.bf16.msra.mxu0 %v340
        %435 = vmatprep.subr.bf16.mxu0 %v345
        %436 = vmatpush1.bf16.msra.mxu0 %v344
        %437 = vmatprep.subr.bf16.mxu0 %v349
        %438 = vmatpush1.bf16.msra.mxu0 %v348
        %439 = vmatprep.subr.bf16.mxu0 0
        %440 = vmatpush1.bf16.msra.mxu0 0
        %441 = vmatprep.subr.bf16.mxu0 0
        %442 = vmatpush1.bf16.msra.mxu0 0
        %443 = vmatprep.subr.bf16.mxu0 0
        %444 = vmatpush1.bf16.msra.mxu0 0
        %445 = vmatprep.subr.bf16.mxu0 0
        %446 = vmatpush1.bf16.msra.mxu0 0
        %447 = vmatprep.subr.bf16.mxu0 0
        %448 = vmatpush1.bf16.msra.mxu0 0
        %449 = vmatprep.subr.bf16.mxu0 0
        %450 = vmatpush1.bf16.msra.mxu0 0
        %451 = vmatprep.subr.bf16.mxu0 0
        %452 = vmatpush1.bf16.msra.mxu0 0
        %453 = vmatprep.subr.bf16.mxu0 0
        %454 = vmatpush1.bf16.msra.mxu0 0
        %455 = vmatprep.mubr.bf16.mxu0 0
        %456 = vmatmul.mubr.bf16.gmra.mrb[0].mxu0 %v167
        %v457 = vpop.f32.mrb[0].mxu0
        %v458 = vadd.f32 %v213, %v457
        %v459 = vpop.f32.mrb[0].mxu0
        %v460 = vadd.f32 %v217, %v459
        %v461 = vpop.f32.mrb[0].mxu0
        %v462 = vpop.f32.mrb[0].mxu0
        %463 = vdwg.mxu0
        %v464 = vpack.c.bf16 %v417, %v417
        %v465 = vpack.c.bf16 %v419, %v419
        %v466 = vpack.c.bf16 %v458, %v458
        %v467 = vpack.c.bf16 %v460, %v460
        %v472 = vunpack.c.l.b16 %v464
        %v473 = vunpack.c.l.b16 %v465
        %v474 = vunpack.c.l.b16 %v466
        %v475 = vunpack.c.l.b16 %v467
        %v476 = vpack.c.b16 %v473, %v472
        %v477 = vpack.c.b16 %v475, %v474
        %480 = vst [vmem:[%s161] sm:$0xff] %v476
        %vm481 = vcmask 1043456
        %vm482 = vcmask 130052
        %vm483 = vmor %vm482, %vm481
        %484 = vst.msk [vmem:[%s161 + $0x8] sm:$0xff] %vm483, %v477
        %s485 = sand.u32 %s93, 1
        %s486 = scalar_lea.sflag [#allocation3], %s485
        %s487 = sand.u32 %s93, 1
        %s488 = smul.addr %s487, 16
        %s489 = scalar_lea.vmem [#allocation2], %s488
        // Predicated region
        $region33: #{tpu_custom_call.1} parent=31 // pred_check
          %p490 = pneg %p103
        $region34: #{tpu_custom_call.1} parent=31 // pred_check_branch
          %492 = sbr.rel (%p490) target = $region36
        $region35: #{tpu_custom_call.1} parent=31 // pred_region
          %s494 = ssub.s32 256, 256
          %495 = vsyncadd %s486, %s494
          %s496 = smul.addr %s17, 4
          %s497 = smul.addr %s496, 64
          %s498 = scalar_lea.hbm %s3, %s497
          %s500 = sshll.u32 %s489, 4
          %s501 = int_to_ptr.vmem [resolvable:$true] %s500
          %503 = dma.vmem_to_hbm [thread:$0]  %s501, 256, %s498, %s486
        $region36: #{tpu_custom_call.1} parent=31 // pred_fallthru
          _
      $region32: #{tpu_custom_call.1} parent=5 // pred_fallthru
        _
      %p504 = scmp.le.s32.totalorder 2, %s12
      // Predicated region
      $region37: #{tpu_custom_call.1} parent=5 // pred_check
        %p505 = pneg %p504
      $region38: #{tpu_custom_call.1} parent=5 // pred_check_branch
        %507 = sbr.rel (%p505) target = $region40
      $region39: #{tpu_custom_call.1} parent=5 // pred_region
        %s508 = ssub.s32 %s12, 2
        // Predicated region
        $region41: #{tpu_custom_call.1} parent=39 // pred_check
          %p509 = pneg %p109
        $region42: #{tpu_custom_call.1} parent=39 // pred_check_branch
          %511 = sbr.rel (%p509) target = $region44
        $region43: #{tpu_custom_call.1} parent=39 // pred_region
          %s512 = sand.u32 %s94, 1
          %s513 = scalar_lea.sflag [#allocation3], %s512
          %s514 = sand.u32 %s94, 1
          %s515 = smul.addr %s514, 16
          %s516 = scalar_lea.vmem [#allocation2], %s515
          %517 = dma.done %s513, 256
        $region44: #{tpu_custom_call.1} parent=39 // pred_fallthru
          _
      $region40: #{tpu_custom_call.1} parent=5 // pred_fallthru
        _
    $region6: #{tpu_custom_call.1} parent=1 // loop_footer
      %s16 = sadd.s32 1, %s12
    $region7: #{tpu_custom_call.1} parent=1 // loop_footer_branch
      %11 = sbr.rel target = $region3
    $region8: #{tpu_custom_call.1} parent=1 // loop_exit
      _
    %518 = vsyncpa [#allocation3], 1
    %s519 = scalar_lea.sflag [#allocation3], 1
    %520 = vsyncpa %s519, 1

</llo_original>
